<compile_context>
chip_gen: v7x
topology: tpu7x:2x2x1
jax: 0.10.0
libtpu: 0.0.40
codegen_flags: <defaults>
</compile_context>

<pallas_src>
import functools

import jax
import jax.numpy as jnp
from jax import lax
from jax.experimental import pallas as pl
from jax.experimental.pallas import tpu as pltpu

_LANE = 128
_DOT_DN = (((1,), (1,)), ((), ()))   # contract the last dim of both operands


# ----------------------------------------------------------------------------
# Core math on VMEM-resident tiles (shared by both kernels).
# ----------------------------------------------------------------------------
def _compute_sims(t_list, s_list, l2renorm, dist):
    """t_list[m]: (R, D_m) targets, native dtype. s_list[m]: (Bb, D_m) sources.

    Returns sims (Bb, R) float32. Row reductions are expressed as MXU matmuls
    (the MXU is idle in this mem-bound kernel), keeping the XLU off the
    per-vreg critical path and the result lane-dense along R.
    """
    Bb = s_list[0].shape[0]
    R = t_list[0].shape[0]
    need_mass = l2renorm or dist

    ip = jnp.zeros((Bb, R), jnp.float32)   # sum_m <t, s>
    tt = jnp.zeros((1, R), jnp.float32)    # sum_m ||t||^2 per target row
    ss = jnp.zeros((Bb, 1), jnp.float32)   # sum_m ||s||^2 per source row

    for t, s in zip(t_list, s_list):
        # (Bb, D) x (R, D) -> (Bb, R) on the MXU, f32 accumulation, native dtypes.
        ip = ip + lax.dot_general(s, t, _DOT_DN,
                                  preferred_element_type=jnp.float32)
        if need_mass:
            # Upcast only inside the kernel (no-op for f32; never touches HBM).
            t32 = t.astype(jnp.float32)
            s32 = s.astype(jnp.float32)
            ones_t = jnp.ones((1, t.shape[-1]), jnp.float32)
            ones_s = jnp.ones((1, s.shape[-1]), jnp.float32)
            # Row sums as matmuls with a ones row -> MXU, lane-dense (1, R).
            tt = tt + lax.dot_general(ones_t, t32 * t32, _DOT_DN,
                                      preferred_element_type=jnp.float32)
            ss = ss + lax.dot_general(s32 * s32, ones_s, _DOT_DN,
                                      preferred_element_type=jnp.float32)

    if not need_mass:
        return ip                                   # plain summed inner product
    if not l2renorm:
        # ||t - s||^2 == tt - 2*ip + ss (exact algebra; mild f32 cancellation
        # only when t ~= s).
        return tt - 2.0 * ip + ss
    rt = lax.rsqrt(jnp.maximum(tt, 1e-6))           # 1 / l2_mass_trg  (EUP)
    rs = lax.rsqrt(jnp.maximum(ss, 1e-6))           # 1 / l2_mass_src  (EUP)
    if dist:
        # sum_d (t/Mt - s/Ms)^2 == tt/Mt^2 - 2*ip/(Mt*Ms) + ss/Ms^2.
        # TODO(synk): expansion can lose precision when the normalized vectors
        # are nearly identical (result ~0 via cancellation of O(1) terms).
        return tt * (rt * rt) - 2.0 * ip * (rt * rs) + ss * (rs * rs)
    return ip * (rt * rs)


# ----------------------------------------------------------------------------
# Kernels.
# ----------------------------------------------------------------------------
def _shared_kernel(*refs, num_mods, l2renorm, dist):
    # All targets shared across the batch: B folded into the tile, so each
    # (tn, D_m) target block is fetched from HBM exactly once per call.
    trg_refs = refs[:num_mods]                 # (tn, D_m) native dtype
    src_refs = refs[num_mods:2 * num_mods]     # (B, D_m)  native dtype (resident)
    out_ref = refs[2 * num_mods]               # (B, tn)   float32, lane-dense
    t_list = [r[...] for r in trg_refs]
    s_list = [r[...] for r in src_refs]
    out_ref[...] = _compute_sims(t_list, s_list, l2renorm, dist)


def _batched_kernel(*refs, num_mods, l2renorm, dist):
    # Per-batch targets: grid is (n, b) with b innermost so shared modalities
    # (block index independent of b) are not re-DMA'd for consecutive b steps.
    trg_refs = refs[:num_mods]                 # (1, tn, D_m)
    src_refs = refs[num_mods:2 * num_mods]     # (1, 1, D_m)
    out_ref = refs[2 * num_mods]               # (1, 1, tn)  float32, lane-dense
    t_list = [r[0] for r in trg_refs]          # (tn, D_m)
    s_list = [r[0] for r in src_refs]          # (1, D_m)
    out_ref[0] = _compute_sims(t_list, s_list, l2renorm, dist)   # (1, tn)


# ----------------------------------------------------------------------------
# Tile sizing (generation aware).
# ----------------------------------------------------------------------------
def _vmem_budget():
    """Returns (per-step byte budget, vmem_limit_bytes)."""
    phys = 64 * 1024 * 1024                    # v7x per-TC VMEM (smallest gen)
    try:
        info = pltpu.get_tpu_info()
        cap = int(getattr(info, "vmem_capacity_bytes", 0) or 0)
        if cap > 0:
            phys = cap
    except Exception:
        pass                                   # safe fallback works on all gens
    vmem_limit = int(phys * 3 // 4)            # ~48 MiB (v7x) / ~96 MiB (v5e/v6e)
    step_budget = int(phys * 3 // 10)          # ~19 MiB (v7x) / ~38 MiB (v5e/v6e)
    return step_budget, vmem_limit


def _choose_tn(N, row_in_bytes, row_tmp_bytes, row_acc_bytes):
    """Rows per tile so double-buffered blocks + f32 temporaries fit the budget.

    tn is a multiple of 128 (lane-dense output block; also a multiple of every
    dtype's sublane packing) unless all of N fits in one tile.
    """
    step_budget, vmem_limit = _vmem_budget()
    per_row = 2 * row_in_bytes + row_tmp_bytes + row_acc_bytes
    tn = step_budget // max(1, per_row)
    tn = max(_LANE, (tn // _LANE) * _LANE)
    # v7x megacore: prefer >= 2 grid steps when each half still carries a
    # multi-MiB payload (harmless on single-core v5e/v6e).
    half = ((pl.cdiv(N, 2) + _LANE - 1) // _LANE) * _LANE
    if half * row_in_bytes >= 2 * 1024 * 1024:
        tn = min(tn, half)
    if tn >= N:
        return N, 1, vmem_limit
    return tn, pl.cdiv(N, tn), vmem_limit


# ----------------------------------------------------------------------------
# Wrapper.
# ----------------------------------------------------------------------------
def sharded_cross_view_inner_product(trg_embds, src_embds, subspaces,
                                     l2renorm=False, tol=1e-5, dist=False,
                                     val=False, *, _tile_rows=None):
    """
    trg_embds: {modality: (B, N, D_m) or (N, D_m)}
    src_embds: {modality: (B, D_m)}
    returns sims: (B, N) float32

    `tol` / `val` kept for signature parity with the torch module (unused, as
    in the reference). `_tile_rows` is a test-only override of the N tile.
    """
    num_mods = len(subspaces)
    B = src_embds[subspaces[0]].shape[0]
    N = trg_embds[subspaces[0]].shape[-2]
    need_mass = l2renorm or dist

    trg_arrays = [trg_embds[m] for m in subspaces]
    src_arrays = [src_embds[m] for m in subspaces]
    row_in = sum(t.shape[-1] * t.dtype.itemsize for t in trg_arrays)
    # f32 upcast + square temporaries only exist on the mass-needing paths.
    row_tmp = (2 * 4 * max(t.shape[-1] for t in trg_arrays)) if need_mass else 0

    all_shared = all(trg_embds[m].ndim == 2 for m in subspaces)

    if all_shared:
        # --- Shared-target path: grid over N only, B folded into the tile. ---
        row_acc = 4 * (4 * B + 4)          # (B, tn) ip/out f32 blocks + tt row
        tn, grid_n, vmem_limit = _choose_tn(N, row_in, row_tmp, row_acc)
        if _tile_rows is not None:
            tn = min(int(_tile_rows), N)
            grid_n = pl.cdiv(N, tn)

        in_specs = [pl.BlockSpec((tn, t.shape[-1]), lambda n: (n, 0))
                    for t in trg_arrays]
        # src rows: constant block index -> fetched once, resident thereafter.
        in_specs += [pl.BlockSpec((B, s.shape[-1]), lambda n: (0, 0))
                     for s in src_arrays]

        kernel = functools.partial(_shared_kernel, num_mods=num_mods,
                                   l2renorm=l2renorm, dist=dist)
        out = pl.pallas_call(
            kernel,
            out_shape=jax.ShapeDtypeStruct((B, N), jnp.float32),
            grid=(grid_n,),
            in_specs=in_specs,
            out_specs=pl.BlockSpec((B, tn), lambda n: (0, n)),
            compiler_params=pltpu.CompilerParams(
                dimension_semantics=("parallel",),
                vmem_limit_bytes=vmem_limit),
        )(*trg_arrays, *src_arrays)
        # TODO(synk): the torch reference drops into ipdb on NaNs; that
        # host-side debug check is omitted here.
        return out

    # --- Per-batch-target path: grid = (n, b), b innermost. -----------------
    trg3, shared_flags = [], []
    for t in trg_arrays:
        shared = t.ndim == 2
        if shared:
            t = t.reshape((1,) + t.shape)   # metadata-only, no B-fold HBM copy
        shared_flags.append(shared)
        trg3.append(t)
    src3 = [s.reshape(B, 1, s.shape[-1]) for s in src_arrays]

    row_acc = 4 * 8                          # (1, tn) accumulators + out x2
    tn, grid_n, vmem_limit = _choose_tn(N, row_in, row_tmp, row_acc)
    if _tile_rows is not None:
        tn = min(int(_tile_rows), N)
        grid_n = pl.cdiv(N, tn)

    in_specs = []
    for t, shared in zip(trg3, shared_flags):
        D = t.shape[-1]
        if shared:
            # Block index independent of b (inner grid axis) -> Pallas skips
            # the re-DMA; the shared target is fetched once per n-tile.
            in_specs.append(pl.BlockSpec((1, tn, D), lambda n, b: (0, n, 0)))
        else:
            in_specs.append(pl.BlockSpec((1, tn, D), lambda n, b: (b, n, 0)))
    in_specs += [pl.BlockSpec((1, 1, s.shape[-1]), lambda n, b: (b, 0, 0))
                 for s in src3]

    kernel = functools.partial(_batched_kernel, num_mods=num_mods,
                               l2renorm=l2renorm, dist=dist)
    out = pl.pallas_call(
        kernel,
        out_shape=jax.ShapeDtypeStruct((B, 1, N), jnp.float32),
        grid=(grid_n, B),                    # n outer: megacore shards n
        in_specs=in_specs,
        out_specs=pl.BlockSpec((1, 1, tn), lambda n, b: (b, 0, n)),
        compiler_params=pltpu.CompilerParams(
            dimension_semantics=("parallel", "parallel"),
            vmem_limit_bytes=vmem_limit),
    )(*trg3, *src3)
    # TODO(synk): the torch reference drops into ipdb on NaNs; that host-side
    # debug check is omitted here.
    return out[:, 0, :]


class InnerProduct:
    """JAX/Pallas equivalent of the torch InnerProduct module (no parameters)."""

    def __call__(self, trg_embds, src_embds, subspaces,
                 l2renorm=False, tol=1e-5, dist=False, val=False):
        return sharded_cross_view_inner_product(
            trg_embds, src_embds, subspaces, l2renorm, tol, dist, val)


if __name__ == "__main__":
    key = jax.random.PRNGKey(0)
    B, N, D = 2, 8, 32
    subspaces = ["audio", "text"]

    trg_embds, src_embds = {}, {}
    for m in subspaces:
        key, k1, k2 = jax.random.split(key, 3)
        trg_embds[m] = jax.random.normal(k1, (B, N, D), dtype=jnp.float32)
        src_embds[m] = jax.random.normal(k2, (B, D), dtype=jnp.float32)

    module = InnerProduct()

    tcat = jnp.concatenate([trg_embds[m] for m in subspaces], axis=-1)
    scat = jnp.concatenate([src_embds[m] for m in subspaces], axis=-1)
    tmass = jnp.sqrt(jnp.clip(jnp.sum(tcat * tcat, -1, keepdims=True), 1e-6))
    smass = jnp.sqrt(jnp.clip(jnp.sum(scat * scat, -1, keepdims=True), 1e-6))

    # 1) plain inner product (per-batch targets)
    sims = jax.block_until_ready(module(trg_embds, src_embds, subspaces))
    ref = jnp.sum(tcat * scat[:, None, :], axis=-1)
    assert sims.shape == (B, N)
    assert jnp.allclose(sims, ref, atol=1e-4, rtol=1e-4)

    # 2) l2renorm
    sims_l2 = jax.block_until_ready(
        module(trg_embds, src_embds, subspaces, l2renorm=True))
    ref_l2 = jnp.sum((tcat / tmass) * (scat / smass)[:, None, :], axis=-1)
    assert jnp.allclose(sims_l2, ref_l2, atol=1e-4, rtol=1e-4)

    # 3) squared distance
    sims_d = jax.block_until_ready(
        module(trg_embds, src_embds, subspaces, dist=True))
    ref_d = jnp.sum((tcat - scat[:, None, :]) ** 2, axis=-1)
    assert jnp.allclose(sims_d, ref_d, atol=1e-3, rtol=1e-4)

    # 4) squared distance + l2renorm (previously untested path)
    sims_dl = jax.block_until_ready(
        module(trg_embds, src_embds, subspaces, dist=True, l2renorm=True))
    ref_dl = jnp.sum((tcat / tmass - (scat / smass)[:, None, :]) ** 2, axis=-1)
    assert jnp.allclose(sims_dl, ref_dl, atol=1e-4, rtol=1e-4)

    # 5) shared (N, D) targets: single-fetch path with B folded into the tile
    key, k1, k2, k3, k4 = jax.random.split(key, 5)
    trg_shared = {"audio": jax.random.normal(k1, (N, D), dtype=jnp.float32),
                  "text": jax.random.normal(k2, (N, D), dtype=jnp.float32)}
    src_shared = {"audio": jax.random.normal(k3, (B, D), dtype=jnp.float32),
                  "text": jax.random.normal(k4, (B, D), dtype=jnp.float32)}
    tcat_s = jnp.concatenate([trg_shared[m] for m in subspaces], axis=-1)
    scat_s = jnp.concatenate([src_shared[m] for m in subspaces], axis=-1)
    tmass_s = jnp.sqrt(jnp.clip(jnp.sum(tcat_s ** 2, -1, keepdims=True), 1e-6))
    smass_s = jnp.sqrt(jnp.clip(jnp.sum(scat_s ** 2, -1, keepdims=True), 1e-6))

    sims_s = jax.block_until_ready(module(trg_shared, src_shared, subspaces))
    ref_s = scat_s @ tcat_s.T
    assert sims_s.shape == (B, N)
    assert jnp.allclose(sims_s, ref_s, atol=1e-4, rtol=1e-4)

    sims_sl2 = jax.block_until_ready(
        module(trg_shared, src_shared, subspaces, l2renorm=True))
    ref_sl2 = (scat_s / smass_s) @ (tcat_s / tmass_s).T
    assert jnp.allclose(sims_sl2, ref_sl2, atol=1e-4, rtol=1e-4)

    sims_sd = jax.block_until_ready(
        module(trg_shared, src_shared, subspaces, dist=True))
    ref_sd = jnp.sum((tcat_s[None, :, :] - scat_s[:, None, :]) ** 2, axis=-1)
    assert jnp.allclose(sims_sd, ref_sd, atol=1e-3, rtol=1e-4)

    # 6) edge tiles (N % tn != 0): garbage rows in the padded final block must
    #    not leak into valid output rows (row-independent math + masked write).
    N2 = 300
    key, k1, k2, k3, k4 = jax.random.split(key, 5)
    trg_e = {"audio": jax.random.normal(k1, (N2, D), dtype=jnp.float32),
             "text": jax.random.normal(k2, (N2, D), dtype=jnp.float32)}
    src_e = {"audio": jax.random.normal(k3, (B, D), dtype=jnp.float32),
             "text": jax.random.normal(k4, (B, D), dtype=jnp.float32)}
    tcat_e = jnp.concatenate([trg_e[m] for m in subspaces], axis=-1)
    scat_e = jnp.concatenate([src_e[m] for m in subspaces], axis=-1)
    tmass_e = jnp.sqrt(jnp.clip(jnp.sum(tcat_e ** 2, -1, keepdims=True), 1e-6))
    smass_e = jnp.sqrt(jnp.clip(jnp.sum(scat_e ** 2, -1, keepdims=True), 1e-6))

    sims_e = jax.block_until_ready(
        sharded_cross_view_inner_product(trg_e, src_e, subspaces,
                                         l2renorm=True, _tile_rows=128))
    ref_e = (scat_e / smass_e) @ (tcat_e / tmass_e).T
    assert jnp.allclose(sims_e, ref_e, atol=1e-4, rtol=1e-4)

    trg_e3 = {m: jnp.broadcast_to(trg_e[m][None], (B, N2, D)) for m in subspaces}
    sims_e3 = jax.block_until_ready(
        sharded_cross_view_inner_product(trg_e3, src_e, subspaces,
                                         dist=True, _tile_rows=128))
    ref_e3 = jnp.sum((tcat_e[None, :, :] - scat_e[:, None, :]) ** 2, axis=-1)
    assert jnp.allclose(sims_e3, ref_e3, atol=1e-3, rtol=1e-4)

    print("KERNEL_OK")
</pallas_src>

<mosaic_0001>
module attributes {stable_mosaic.version = 11 : i64} {
  func.func @_batched_kernel(%arg0: i32, %arg1: i32, %arg2: memref<1x8x32xf32, #tpu.memory_space<vmem>>, %arg3: memref<1x8x32xf32, #tpu.memory_space<vmem>>, %arg4: memref<1x1x32xf32, #tpu.memory_space<vmem>>, %arg5: memref<1x1x32xf32, #tpu.memory_space<vmem>>, %arg6: memref<1x1x8xf32, #tpu.memory_space<vmem>>) attributes {dimension_semantics = [#tpu.dimension_semantics<parallel>, #tpu.dimension_semantics<parallel>], iteration_bounds = array<i64: 1, 2>, scalar_prefetch = 0 : i64, scratch_operands = 0 : i64, tpu.core_type = #tpu.core_type<tc>, window_params = [{transform_indices = @transform_0, window_bounds = array<i64: 1, 8, 32>}, {transform_indices = @transform_1, window_bounds = array<i64: 1, 8, 32>}, {transform_indices = @transform_2, window_bounds = array<i64: 1, 1, 32>}, {transform_indices = @transform_3, window_bounds = array<i64: 1, 1, 32>}, {transform_indices = @transform_4, window_bounds = array<i64: 1, 1, 8>}]} {
    %c0 = arith.constant 0 : index
    %c0_0 = arith.constant 0 : index
    %c0_1 = arith.constant 0 : index
    %0 = vector.load %arg2[%c0, %c0_0, %c0_1] : memref<1x8x32xf32, #tpu.memory_space<vmem>>, vector<1x8x32xf32>
    %1 = vector.shape_cast %0 : vector<1x8x32xf32> to vector<8x32xf32>
    %c0_2 = arith.constant 0 : index
    %c0_3 = arith.constant 0 : index
    %c0_4 = arith.constant 0 : index
    %2 = vector.load %arg3[%c0_2, %c0_3, %c0_4] : memref<1x8x32xf32, #tpu.memory_space<vmem>>, vector<1x8x32xf32>
    %3 = vector.shape_cast %2 : vector<1x8x32xf32> to vector<8x32xf32>
    %c0_5 = arith.constant 0 : index
    %c0_6 = arith.constant 0 : index
    %c0_7 = arith.constant 0 : index
    %4 = vector.load %arg4[%c0_5, %c0_6, %c0_7] : memref<1x1x32xf32, #tpu.memory_space<vmem>>, vector<1x1x32xf32>
    %5 = vector.shape_cast %4 : vector<1x1x32xf32> to vector<1x32xf32>
    %c0_8 = arith.constant 0 : index
    %c0_9 = arith.constant 0 : index
    %c0_10 = arith.constant 0 : index
    %6 = vector.load %arg5[%c0_8, %c0_9, %c0_10] : memref<1x1x32xf32, #tpu.memory_space<vmem>>, vector<1x1x32xf32>
    %7 = vector.shape_cast %6 : vector<1x1x32xf32> to vector<1x32xf32>
    %cst = arith.constant 0.000000e+00 : f32
    %8 = vector.broadcast %cst : f32 to vector<1x8xf32>
    %cst_11 = arith.constant dense<0.000000e+00> : vector<1x8xf32>
    %9 = tpu.matmul %5, %1, %cst_11 {dimension_numbers = #tpu.dot_dimension_numbers<[1], [1], [0], [0], [0, 0, 1, 0], [], []>} : vector<1x32xf32>, vector<8x32xf32>, vector<1x8xf32> -> vector<1x8xf32>
    %10 = arith.addf %8, %9 : vector<1x8xf32>
    %cst_12 = arith.constant dense<0.000000e+00> : vector<1x8xf32>
    %11 = tpu.matmul %7, %3, %cst_12 {dimension_numbers = #tpu.dot_dimension_numbers<[1], [1], [0], [0], [0, 0, 1, 0], [], []>} : vector<1x32xf32>, vector<8x32xf32>, vector<1x8xf32> -> vector<1x8xf32>
    %12 = arith.addf %10, %11 : vector<1x8xf32>
    %c0_13 = arith.constant 0 : index
    %c0_14 = arith.constant 0 : index
    %c0_15 = arith.constant 0 : index
    %13 = vector.load %arg6[%c0_13, %c0_14, %c0_15] : memref<1x1x8xf32, #tpu.memory_space<vmem>>, vector<1x1x8xf32>
    %14 = vector.shape_cast %13 : vector<1x1x8xf32> to vector<1x8xf32>
    %15 = vector.shape_cast %12 : vector<1x8xf32> to vector<1x1x8xf32>
    tpu.vector_store %arg6[%c0_13, %c0_14, %c0_15], %15 {strides = array<i32>} : memref<1x1x8xf32, #tpu.memory_space<vmem>>, vector<1x1x8xf32>,
    return
  }
  func.func @transform_0(%arg0: i32, %arg1: i32) -> (i32, i32, i32) {
    %c0_i32 = arith.constant 0 : i32
    %c0_i32_0 = arith.constant 0 : i32
    return %arg1, %arg0, %c0_i32 : i32, i32, i32
  }
  func.func @transform_1(%arg0: i32, %arg1: i32) -> (i32, i32, i32) {
    %c0_i32 = arith.constant 0 : i32
    %c0_i32_0 = arith.constant 0 : i32
    return %arg1, %arg0, %c0_i32 : i32, i32, i32
  }
  func.func @transform_2(%arg0: i32, %arg1: i32) -> (i32, i32, i32) {
    %c0_i32 = arith.constant 0 : i32
    %c0_i32_0 = arith.constant 0 : i32
    %c0_i32_1 = arith.constant 0 : i32
    return %arg1, %c0_i32, %c0_i32_0 : i32, i32, i32
  }
  func.func @transform_3(%arg0: i32, %arg1: i32) -> (i32, i32, i32) {
    %c0_i32 = arith.constant 0 : i32
    %c0_i32_0 = arith.constant 0 : i32
    %c0_i32_1 = arith.constant 0 : i32
    return %arg1, %c0_i32, %c0_i32_0 : i32, i32, i32
  }
  func.func @transform_4(%arg0: i32, %arg1: i32) -> (i32, i32, i32) {
    %c0_i32 = arith.constant 0 : i32
    %c0_i32_0 = arith.constant 0 : i32
    return %arg1, %c0_i32, %arg0 : i32, i32, i32
  }
}

</mosaic_0001>

<llo_original>
// kernel: tpu_custom_call.1
$region0: #{tpu_custom_call.1}
  #allocation0 [shape = 'u32[]', space=smem, size = 0x4, offset = 0x4, fixed_abs, tag = 'smem constant byte address 0x4 - core index']
  #allocation1 [shape = 'u32[144,128]{1,0:T(1,128)}', space=vmem, size = 0x12000, scoped, tag = 'internal scratch']
  %s0 = inlined_call_operand.hbm [shape: f32[2,8,32], index: 0, kind: input, shape index: {}]
  %s1 = inlined_call_operand.hbm [shape: f32[2,8,32], index: 1, kind: input, shape index: {}]
  %s2 = inlined_call_operand.vmem [shape: f32[2,1,32], index: 2, kind: input, shape index: {}]
  %s3 = inlined_call_operand.vmem [shape: f32[2,1,32], index: 3, kind: input, shape index: {}]
  %s4 = inlined_call_operand.hbm [shape: f32[2,1,8], index: 4, kind: output, shape index: {}]
  %s5 = sld [smem:[#allocation0]]
  $region57: #{tpu_custom_call.1} parent=0
    _
  %s7 = ssub.s32 1, %s5
  %s8 = scalar_select 0, %s7, %s5
  $region1: #{tpu_custom_call.1} parent=0
    #allocation2 [shape = 'u8[8192]{0}', space=vmem, size = 0x2000, scoped, tag = 'input window, operand 0']
    #allocation3 [shape = 's32[2]{0}', space=sflag, size = 0x8, scoped, tag = 'scoped memory for tpu_custom_call.1']
    #allocation4 [shape = 's32[2]{0}', space=sflag, size = 0x8, scoped, tag = 'scoped memory for tpu_custom_call.1']
    #allocation5 [shape = 'u8[8192]{0}', space=vmem, size = 0x2000, scoped, tag = 'input window, operand 1']
    #allocation6 [shape = 's32[2]{0}', space=sflag, size = 0x8, scoped, tag = 'scoped memory for tpu_custom_call.1']
    #allocation7 [shape = 'u8[1024]{0}', space=vmem, size = 0x400, scoped, tag = 'output window, operand 0']
    %9 = vsyncpa [#allocation3], 0
    %s10 = scalar_lea.sflag [#allocation3], 1
    %11 = vsyncpa %s10, 0
    %12 = vsyncpa [#allocation6], 0
    %s13 = scalar_lea.sflag [#allocation6], 1
    %14 = vsyncpa %s13, 0
    %15 = vsyncpa [#allocation4], 0
    %s16 = scalar_lea.sflag [#allocation4], 1
    %17 = vsyncpa %s16, 0
    loop: start=0, step=1, limit=4
    $region2: #{tpu_custom_call.1} parent=1 // loop_pre_header
      _
    $region3: #{tpu_custom_call.1} parent=1 // loop_header
      %s19 = sphi 0, %s23
      %p20 = scmp.ge.s32.totalorder %s19, 4
      %s26 = sphi 0, %s38
      %s27 = sphi 0, %s34
      %s28 = sphi 0, %s26
      %s29 = sphi 0, %s27
      %s30 = sphi 0, %s28
      %s31 = sphi 0, %s29
      %s43 = sphi 0, %s45
      %s46 = sphi 0, %s43
      %s47 = sphi 0, %s46
      %s63 = sphi 0, %s47
      %s71 = sphi 0, %s73
      %s74 = sphi 0, %s71
      %s75 = sphi 0, %s74
      %s91 = sphi 0, %s75
      %s97 = sphi 0, %s99
      %s100 = sphi 0, %s97
      %s101 = sphi 0, %s100
      %s117 = sphi 0, %s101
      %s123 = sphi 0, %s125
      %s126 = sphi 0, %s123
      %s127 = sphi 0, %s126
      %s143 = sphi 0, %s127
      %s151 = sphi 0, %s153
      %s154 = sphi 0, %s151
      %s155 = sphi 0, %s154
      %s171 = sphi 0, %s155
    $region4: #{tpu_custom_call.1} parent=1 // loop_header_branch
      %22 = sbr.rel (%p20) target = $region8
    $region5: #{tpu_custom_call.1} parent=1 // loop_body
      %s24 = ssub.s32 %s19, 1
      %s25 = ssub.s32 %s19, 2
      %s32 = sadd.s32 1, %s27
      %p33 = scmp.ge.s32.totalorder %s32, 2
      %s34 = scalar_select %p33, 0, %s32
      %s35 = sadd.s32 1, %s26
      %s36 = scalar_select %p33, %s35, %s26
      %p37 = scmp.ge.s32.totalorder %s36, 1
      %s38 = scalar_select %p37, 0, %s36
      %s39 = ssub.s32 %s27, %s34
      %s40 = ssub.s32 %s26, %s38
      %s41 = sor.u32 %s39, %s40
      %p42 = scmp.eq.s32.totalorder %s41, 0
      %s44 = sadd.s32 %s43, 1
      %s45 = scalar_select %p42, %s43, %s44
      %p48 = pneg %p42
      %p49 = scmp.eq.s32.totalorder %s19, 1
      %p50 = por %p48, %p49
      %p51 = scmp.ne.s32.totalorder %s43, %s46
      %p52 = scmp.eq.s32.totalorder %s19, 0
      %p53 = por %p51, %p52
      %p54 = scmp.ne.s32.totalorder %s43, %s46
      %p55 = scmp.eq.s32.totalorder %s24, 1
      %p56 = por %p54, %p55
      %p57 = scmp.ne.s32.totalorder %s46, %s47
      %p58 = scmp.eq.s32.totalorder %s24, 0
      %p59 = por %p57, %p58
      %p60 = scmp.ne.s32.totalorder %s46, %s47
      %p61 = scmp.eq.s32.totalorder %s25, 1
      %p62 = por %p60, %p61
      %p64 = scmp.ne.s32.totalorder %s47, %s63
      %p65 = scmp.eq.s32.totalorder %s25, 0
      %p66 = por %p64, %p65
      %s67 = ssub.s32 %s27, %s34
      %s68 = ssub.s32 %s26, %s38
      %s69 = sor.u32 %s67, %s68
      %p70 = scmp.eq.s32.totalorder %s69, 0
      %s72 = sadd.s32 %s71, 1
      %s73 = scalar_select %p70, %s71, %s72
      %p76 = pneg %p70
      %p77 = scmp.eq.s32.totalorder %s19, 1
      %p78 = por %p76, %p77
      %p79 = scmp.ne.s32.totalorder %s71, %s74
      %p80 = scmp.eq.s32.totalorder %s19, 0
      %p81 = por %p79, %p80
      %p82 = scmp.ne.s32.totalorder %s71, %s74
      %p83 = scmp.eq.s32.totalorder %s24, 1
      %p84 = por %p82, %p83
      %p85 = scmp.ne.s32.totalorder %s74, %s75
      %p86 = scmp.eq.s32.totalorder %s24, 0
      %p87 = por %p85, %p86
      %p88 = scmp.ne.s32.totalorder %s74, %s75
      %p89 = scmp.eq.s32.totalorder %s25, 1
      %p90 = por %p88, %p89
      %p92 = scmp.ne.s32.totalorder %s75, %s91
      %p93 = scmp.eq.s32.totalorder %s25, 0
      %p94 = por %p92, %p93
      %s95 = ssub.s32 %s27, %s34
      %p96 = scmp.eq.s32.totalorder %s95, 0
      %s98 = sadd.s32 %s97, 1
      %s99 = scalar_select %p96, %s97, %s98
      %p102 = pneg %p96
      %p103 = scmp.eq.s32.totalorder %s19, 1
      %p104 = por %p102, %p103
      %p105 = scmp.ne.s32.totalorder %s97, %s100
      %p106 = scmp.eq.s32.totalorder %s19, 0
      %p107 = por %p105, %p106
      %p108 = scmp.ne.s32.totalorder %s97, %s100
      %p109 = scmp.eq.s32.totalorder %s24, 1
      %p110 = por %p108, %p109
      %p111 = scmp.ne.s32.totalorder %s100, %s101
      %p112 = scmp.eq.s32.totalorder %s24, 0
      %p113 = por %p111, %p112
      %p114 = scmp.ne.s32.totalorder %s100, %s101
      %p115 = scmp.eq.s32.totalorder %s25, 1
      %p116 = por %p114, %p115
      %p118 = scmp.ne.s32.totalorder %s101, %s117
      %p119 = scmp.eq.s32.totalorder %s25, 0
      %p120 = por %p118, %p119
      %s121 = ssub.s32 %s27, %s34
      %p122 = scmp.eq.s32.totalorder %s121, 0
      %s124 = sadd.s32 %s123, 1
      %s125 = scalar_select %p122, %s123, %s124
      %p128 = pneg %p122
      %p129 = scmp.eq.s32.totalorder %s19, 1
      %p130 = por %p128, %p129
      %p131 = scmp.ne.s32.totalorder %s123, %s126
      %p132 = scmp.eq.s32.totalorder %s19, 0
      %p133 = por %p131, %p132
      %p134 = scmp.ne.s32.totalorder %s123, %s126
      %p135 = scmp.eq.s32.totalorder %s24, 1
      %p136 = por %p134, %p135
      %p137 = scmp.ne.s32.totalorder %s126, %s127
      %p138 = scmp.eq.s32.totalorder %s24, 0
      %p139 = por %p137, %p138
      %p140 = scmp.ne.s32.totalorder %s126, %s127
      %p141 = scmp.eq.s32.totalorder %s25, 1
      %p142 = por %p140, %p141
      %p144 = scmp.ne.s32.totalorder %s127, %s143
      %p145 = scmp.eq.s32.totalorder %s25, 0
      %p146 = por %p144, %p145
      %s147 = ssub.s32 %s27, %s34
      %s148 = ssub.s32 %s26, %s38
      %s149 = sor.u32 %s147, %s148
      %p150 = scmp.eq.s32.totalorder %s149, 0
      %s152 = sadd.s32 %s151, 1
      %s153 = scalar_select %p150, %s151, %s152
      %p156 = pneg %p150
      %p157 = scmp.eq.s32.totalorder %s19, 1
      %p158 = por %p156, %p157
      %p159 = scmp.ne.s32.totalorder %s151, %s154
      %p160 = scmp.eq.s32.totalorder %s19, 0
      %p161 = por %p159, %p160
      %p162 = scmp.ne.s32.totalorder %s151, %s154
      %p163 = scmp.eq.s32.totalorder %s24, 1
      %p164 = por %p162, %p163
      %p165 = scmp.ne.s32.totalorder %s154, %s155
      %p166 = scmp.eq.s32.totalorder %s24, 0
      %p167 = por %p165, %p166
      %p168 = scmp.ne.s32.totalorder %s154, %s155
      %p169 = scmp.eq.s32.totalorder %s25, 1
      %p170 = por %p168, %p169
      %p172 = scmp.ne.s32.totalorder %s155, %s171
      %p173 = scmp.eq.s32.totalorder %s25, 0
      %p174 = por %p172, %p173
      %p175 = scmp.le.s32.totalorder 1, %s19
      %p176 = scmp.lt.s32.totalorder %s19, 3
      %p177 = pnand %p175, %p176
      %p178 = pneg %p177
      // Predicated region
      $region9: #{tpu_custom_call.1} parent=5 // pred_check
        _
      $region10: #{tpu_custom_call.1} parent=5 // pred_check_branch
        %180 = sbr.rel (%p177) target = $region12
      $region11: #{tpu_custom_call.1} parent=5 // pred_region
        %s181 = ssub.s32 %s19, 1
      $region12: #{tpu_custom_call.1} parent=5 // pred_fallthru
        _
      %p182 = scmp.lt.s32.totalorder %s19, 2
      // Predicated region
      $region13: #{tpu_custom_call.1} parent=5 // pred_check
        %p183 = pneg %p182
      $region14: #{tpu_custom_call.1} parent=5 // pred_check_branch
        %185 = sbr.rel (%p183) target = $region16
      $region15: #{tpu_custom_call.1} parent=5 // pred_region
        // Predicated region
        $region17: #{tpu_custom_call.1} parent=15 // pred_check
          %p186 = pneg %p53
        $region18: #{tpu_custom_call.1} parent=15 // pred_check_branch
          %188 = sbr.rel (%p186) target = $region20
        $region19: #{tpu_custom_call.1} parent=15 // pred_region
          %s189 = sand.u32 %s43, 1
          %s190 = scalar_lea.sflag [#allocation3], %s189
          %s191 = sand.u32 %s43, 1
          %s192 = smul.addr %s191, 8
          %s193 = scalar_lea.vmem [#allocation2], %s192
          %s195 = ssub.s32 128, 128
          %196 = vsyncadd %s190, %s195
          %s197 = sadd.s32 %s26, %s27
          %s198 = smul.addr %s197, 128
          %s199 = scalar_lea.hbm %s0, %s198
          %s201 = sshll.u32 %s193, 4
          %s202 = int_to_ptr.vmem [resolvable:$true] %s201
          %204 = dma.hbm_to_vmem [thread:$0]  %s199, 128, %s202, %s190
        $region20: #{tpu_custom_call.1} parent=15 // pred_fallthru
          _
        // Predicated region
        $region21: #{tpu_custom_call.1} parent=15 // pred_check
          %p205 = pneg %p81
        $region22: #{tpu_custom_call.1} parent=15 // pred_check_branch
          %207 = sbr.rel (%p205) target = $region24
        $region23: #{tpu_custom_call.1} parent=15 // pred_region
          %s208 = sand.u32 %s71, 1
          %s209 = scalar_lea.sflag [#allocation6], %s208
          %s210 = sand.u32 %s71, 1
          %s211 = smul.addr %s210, 8
          %s212 = scalar_lea.vmem [#allocation5], %s211
          %s214 = ssub.s32 128, 128
          %215 = vsyncadd %s209, %s214
          %s216 = sadd.s32 %s26, %s27
          %s217 = smul.addr %s216, 128
          %s218 = scalar_lea.hbm %s1, %s217
          %s220 = sshll.u32 %s212, 4
          %s221 = int_to_ptr.vmem [resolvable:$true] %s220
          %223 = dma.hbm_to_vmem [thread:$0]  %s218, 128, %s221, %s209
        $region24: #{tpu_custom_call.1} parent=15 // pred_fallthru
          _
        // Predicated region
        $region25: #{tpu_custom_call.1} parent=15 // pred_check
          %p224 = pneg %p107
        $region26: #{tpu_custom_call.1} parent=15 // pred_check_branch
          %226 = sbr.rel (%p224) target = $region28
        $region27: #{tpu_custom_call.1} parent=15 // pred_region
          %p227 = scmp.lt.s32.totalorder %s27, 1
          %s228 = scalar_select %p227, %s27, 1
          %s229 = scalar_lea.vmem %s2, %s228
        $region28: #{tpu_custom_call.1} parent=15 // pred_fallthru
          _
        // Predicated region
        $region29: #{tpu_custom_call.1} parent=15 // pred_check
          %p230 = pneg %p133
        $region30: #{tpu_custom_call.1} parent=15 // pred_check_branch
          %232 = sbr.rel (%p230) target = $region32
        $region31: #{tpu_custom_call.1} parent=15 // pred_region
          %p233 = scmp.lt.s32.totalorder %s27, 1
          %s234 = scalar_select %p233, %s27, 1
          %s235 = scalar_lea.vmem %s3, %s234
        $region32: #{tpu_custom_call.1} parent=15 // pred_fallthru
          _
      $region16: #{tpu_custom_call.1} parent=5 // pred_fallthru
        _
      %p236 = scmp.le.s32.totalorder 1, %s19
      %p237 = scmp.lt.s32.totalorder %s19, 3
      %p238 = pnand %p236, %p237
      %p239 = pneg %p238
      // Predicated region
      $region33: #{tpu_custom_call.1} parent=5 // pred_check
        _
      $region34: #{tpu_custom_call.1} parent=5 // pred_check_branch
        %241 = sbr.rel (%p238) target = $region36
      $region35: #{tpu_custom_call.1} parent=5 // pred_region
        %s242 = ssub.s32 %s19, 1
        %s243 = sand.u32 %s46, 1
        %s244 = scalar_lea.sflag [#allocation3], %s243
        %s245 = sand.u32 %s46, 1
        %s246 = smul.addr %s245, 8
        %s247 = scalar_lea.vmem [#allocation2], %s246
        // Predicated region
        $region37: #{tpu_custom_call.1} parent=35 // pred_check
          %p248 = pneg %p59
        $region38: #{tpu_custom_call.1} parent=35 // pred_check_branch
          %250 = sbr.rel (%p248) target = $region40
        $region39: #{tpu_custom_call.1} parent=35 // pred_region
          %251 = dma.done %s244, 128
        $region40: #{tpu_custom_call.1} parent=35 // pred_fallthru
          _
        %s252 = sand.u32 %s74, 1
        %s253 = scalar_lea.sflag [#allocation6], %s252
        %s254 = sand.u32 %s74, 1
        %s255 = smul.addr %s254, 8
        %s256 = scalar_lea.vmem [#allocation5], %s255
        // Predicated region
        $region41: #{tpu_custom_call.1} parent=35 // pred_check
          %p257 = pneg %p87
        $region42: #{tpu_custom_call.1} parent=35 // pred_check_branch
          %259 = sbr.rel (%p257) target = $region44
        $region43: #{tpu_custom_call.1} parent=35 // pred_region
          %260 = dma.done %s253, 128
        $region44: #{tpu_custom_call.1} parent=35 // pred_fallthru
          _
        %s261 = sand.u32 %s46, 1
        %s262 = scalar_lea.sflag [#allocation3], %s261
        %s263 = sand.u32 %s46, 1
        %s264 = smul.addr %s263, 8
        %s265 = scalar_lea.vmem [#allocation2], %s264
        %p266 = pneg %p59
        %p267 = pneg %p56
        %s268 = sand.u32 %s74, 1
        %s269 = scalar_lea.sflag [#allocation6], %s268
        %s270 = sand.u32 %s74, 1
        %s271 = smul.addr %s270, 8
        %s272 = scalar_lea.vmem [#allocation5], %s271
        %p273 = pneg %p87
        %p274 = pneg %p84
        %p275 = scmp.lt.s32.totalorder %s29, 1
        %s276 = scalar_select %p275, %s29, 1
        %s277 = scalar_lea.vmem %s2, %s276
        %p278 = pneg %p113
        %p279 = pneg %p110
        %p280 = scmp.lt.s32.totalorder %s29, 1
        %s281 = scalar_select %p280, %s29, 1
        %s282 = scalar_lea.vmem %s3, %s281
        %p283 = pneg %p139
        %p284 = pneg %p136
        %p285 = pneg %p167
        %p286 = pneg %p164
        %s287 = sand.u32 %s154, 1
        %s288 = scalar_lea.sflag [#allocation4], %s287
        %s289 = sand.u32 %s154, 1
        %s290 = scalar_lea.vmem [#allocation7], %s289
        %p291 = scmp.lt.s32.totalorder %s29, 1
        %s292 = scalar_select %p291, %s29, 1
        %s293 = scalar_lea.vmem %s2, %s292
        %p294 = scmp.lt.s32.totalorder %s29, 1
        %s295 = scalar_select %p294, %s29, 1
        %s296 = scalar_lea.vmem %s3, %s295
        %v297 = vld [vmem:[%s247] sm:$0xff]
        %v298 = vld [vmem:[%s256] sm:$0xff]
        %v299 = vld [vmem:[%s293] sm:$0x1]
        %v300 = vld [vmem:[%s296] sm:$0x1]
        %vm301 = vcmask 261120
        %v303 = vsel %vm301, %v300, 0
        %v306 = vsel %vm301, %v298, 0
        %308 = vmatprep.subr.mxu0 0.0
        %309 = vmatpush1.xpose.msra.mxu0 %v306
        %310 = vmatprep.subr.mxu0 0.0
        %311 = vmatpush1.xpose.msra.mxu0 0.0
        %312 = vmatprep.subr.mxu0 0.0
        %313 = vmatpush1.xpose.msra.mxu0 0.0
        %314 = vmatprep.subr.mxu0 0.0
        %315 = vmatpush1.xpose.msra.mxu0 0.0
        %316 = vmatprep.subr.mxu0 0.0
        %317 = vmatpush1.xpose.msra.mxu0 0.0
        %318 = vmatprep.subr.mxu0 0.0
        %319 = vmatpush1.xpose.msra.mxu0 0.0
        %320 = vmatprep.subr.mxu0 0.0
        %321 = vmatpush1.xpose.msra.mxu0 0.0
        %322 = vmatprep.subr.mxu0 0.0
        %323 = vmatpush1.xpose.msra.mxu0 0.0
        %324 = vmatprep.subr.mxu0 0.0
        %325 = vmatpush1.xpose.msra.mxu0 0.0
        %326 = vmatprep.subr.mxu0 0.0
        %327 = vmatpush1.xpose.msra.mxu0 0.0
        %328 = vmatprep.subr.mxu0 0.0
        %329 = vmatpush1.xpose.msra.mxu0 0.0
        %330 = vmatprep.subr.mxu0 0.0
        %331 = vmatpush1.xpose.msra.mxu0 0.0
        %332 = vmatprep.subr.mxu0 0.0
        %333 = vmatpush1.xpose.msra.mxu0 0.0
        %334 = vmatprep.subr.mxu0 0.0
        %335 = vmatpush1.xpose.msra.mxu0 0.0
        %336 = vmatprep.subr.mxu0 0.0
        %337 = vmatpush1.xpose.msra.mxu0 0.0
        %338 = vmatprep.subr.mxu0 0.0
        %339 = vmatpush1.xpose.msra.mxu0 0.0
        %340 = vmatprep.subr.mxu0 0.0
        %341 = vmatpush1.xpose.msra.mxu0 0.0
        %342 = vmatprep.subr.mxu0 0.0
        %343 = vmatpush1.xpose.msra.mxu0 0.0
        %344 = vmatprep.subr.mxu0 0.0
        %345 = vmatpush1.xpose.msra.mxu0 0.0
        %346 = vmatprep.subr.mxu0 0.0
        %347 = vmatpush1.xpose.msra.mxu0 0.0
        %348 = vmatprep.subr.mxu0 0.0
        %349 = vmatpush1.xpose.msra.mxu0 0.0
        %350 = vmatprep.subr.mxu0 0.0
        %351 = vmatpush1.xpose.msra.mxu0 0.0
        %352 = vmatprep.subr.mxu0 0.0
        %353 = vmatpush1.xpose.msra.mxu0 0.0
        %354 = vmatprep.subr.mxu0 0.0
        %355 = vmatpush1.xpose.msra.mxu0 0.0
        %356 = vmatprep.subr.mxu0 0.0
        %357 = vmatpush1.xpose.msra.mxu0 0.0
        %358 = vmatprep.subr.mxu0 0.0
        %359 = vmatpush1.xpose.msra.mxu0 0.0
        %360 = vmatprep.subr.mxu0 0.0
        %361 = vmatpush1.xpose.msra.mxu0 0.0
        %362 = vmatprep.subr.mxu0 0.0
        %363 = vmatpush1.xpose.msra.mxu0 0.0
        %364 = vmatprep.subr.mxu0 0.0
        %365 = vmatpush1.xpose.msra.mxu0 0.0
        %366 = vmatprep.subr.mxu0 0.0
        %367 = vmatpush1.xpose.msra.mxu0 0.0
        %368 = vmatprep.subr.mxu0 0.0
        %369 = vmatpush1.xpose.msra.mxu0 0.0
        %370 = vmatprep.subr.mxu0 0.0
        %371 = vmatpush1.xpose.msra.mxu0 0.0
        %372 = vmatprep.mubr.f32.mxu0 0.0
        %373 = vmatmul.mubr.f32.gmra.mrb[0].mxu0 %v303
        %v374 = vpop.f32.mrb[0].mxu0
        %v375 = vadd.f32 0.0, %v374
        %v376 = vpop.f32.mrb[0].mxu0
        %377 = vdwg.mxu0
        %v379 = vsel %vm301, %v299, 0
        %v382 = vsel %vm301, %v297, 0
        %384 = vmatprep.subr.mxu0 0.0
        %385 = vmatpush1.xpose.msra.mxu0 %v382
        %386 = vmatprep.subr.mxu0 0.0
        %387 = vmatpush1.xpose.msra.mxu0 0.0
        %388 = vmatprep.subr.mxu0 0.0
        %389 = vmatpush1.xpose.msra.mxu0 0.0
        %390 = vmatprep.subr.mxu0 0.0
        %391 = vmatpush1.xpose.msra.mxu0 0.0
        %392 = vmatprep.subr.mxu0 0.0
        %393 = vmatpush1.xpose.msra.mxu0 0.0
        %394 = vmatprep.subr.mxu0 0.0
        %395 = vmatpush1.xpose.msra.mxu0 0.0
        %396 = vmatprep.subr.mxu0 0.0
        %397 = vmatpush1.xpose.msra.mxu0 0.0
        %398 = vmatprep.subr.mxu0 0.0
        %399 = vmatpush1.xpose.msra.mxu0 0.0
        %400 = vmatprep.subr.mxu0 0.0
        %401 = vmatpush1.xpose.msra.mxu0 0.0
        %402 = vmatprep.subr.mxu0 0.0
        %403 = vmatpush1.xpose.msra.mxu0 0.0
        %404 = vmatprep.subr.mxu0 0.0
        %405 = vmatpush1.xpose.msra.mxu0 0.0
        %406 = vmatprep.subr.mxu0 0.0
        %407 = vmatpush1.xpose.msra.mxu0 0.0
        %408 = vmatprep.subr.mxu0 0.0
        %409 = vmatpush1.xpose.msra.mxu0 0.0
        %410 = vmatprep.subr.mxu0 0.0
        %411 = vmatpush1.xpose.msra.mxu0 0.0
        %412 = vmatprep.subr.mxu0 0.0
        %413 = vmatpush1.xpose.msra.mxu0 0.0
        %414 = vmatprep.subr.mxu0 0.0
        %415 = vmatpush1.xpose.msra.mxu0 0.0
        %416 = vmatprep.subr.mxu0 0.0
        %417 = vmatpush1.xpose.msra.mxu0 0.0
        %418 = vmatprep.subr.mxu0 0.0
        %419 = vmatpush1.xpose.msra.mxu0 0.0
        %420 = vmatprep.subr.mxu0 0.0
        %421 = vmatpush1.xpose.msra.mxu0 0.0
        %422 = vmatprep.subr.mxu0 0.0
        %423 = vmatpush1.xpose.msra.mxu0 0.0
        %424 = vmatprep.subr.mxu0 0.0
        %425 = vmatpush1.xpose.msra.mxu0 0.0
        %426 = vmatprep.subr.mxu0 0.0
        %427 = vmatpush1.xpose.msra.mxu0 0.0
        %428 = vmatprep.subr.mxu0 0.0
        %429 = vmatpush1.xpose.msra.mxu0 0.0
        %430 = vmatprep.subr.mxu0 0.0
        %431 = vmatpush1.xpose.msra.mxu0 0.0
        %432 = vmatprep.subr.mxu0 0.0
        %433 = vmatpush1.xpose.msra.mxu0 0.0
        %434 = vmatprep.subr.mxu0 0.0
        %435 = vmatpush1.xpose.msra.mxu0 0.0
        %436 = vmatprep.subr.mxu0 0.0
        %437 = vmatpush1.xpose.msra.mxu0 0.0
        %438 = vmatprep.subr.mxu0 0.0
        %439 = vmatpush1.xpose.msra.mxu0 0.0
        %440 = vmatprep.subr.mxu0 0.0
        %441 = vmatpush1.xpose.msra.mxu0 0.0
        %442 = vmatprep.subr.mxu0 0.0
        %443 = vmatpush1.xpose.msra.mxu0 0.0
        %444 = vmatprep.subr.mxu0 0.0
        %445 = vmatpush1.xpose.msra.mxu0 0.0
        %446 = vmatprep.subr.mxu0 0.0
        %447 = vmatpush1.xpose.msra.mxu0 0.0
        %448 = vmatprep.mubr.f32.mxu0 0.0
        %449 = vmatmul.mubr.f32.gmra.mrb[0].mxu0 %v379
        %v450 = vpop.f32.mrb[0].mxu0
        %v451 = vadd.f32 %v375, %v450
        %v452 = vpop.f32.mrb[0].mxu0
        %453 = vdwg.mxu0
        %vm454 = vcmask 57344
        %455 = vst.msk [vmem:[%s290] sm:$0x1] %vm454, %v451
        %s456 = sand.u32 %s154, 1
        %s457 = scalar_lea.sflag [#allocation4], %s456
        %s458 = sand.u32 %s154, 1
        %s459 = scalar_lea.vmem [#allocation7], %s458
        // Predicated region
        $region45: #{tpu_custom_call.1} parent=35 // pred_check
          %p460 = pneg %p164
        $region46: #{tpu_custom_call.1} parent=35 // pred_check_branch
          %462 = sbr.rel (%p460) target = $region48
        $region47: #{tpu_custom_call.1} parent=35 // pred_region
          %s464 = ssub.s32 16, 16
          %465 = vsyncadd %s457, %s464
          %s466 = sadd.s32 %s28, %s29
          %s467 = smul.addr %s466, 16
          %s468 = scalar_lea.hbm %s4, %s467
          %s470 = sshll.u32 %s459, 4
          %s471 = int_to_ptr.vmem [resolvable:$true] %s470
          %473 = dma.vmem_to_hbm [thread:$0]  %s471, 16, %s468, %s457
        $region48: #{tpu_custom_call.1} parent=35 // pred_fallthru
          _
      $region36: #{tpu_custom_call.1} parent=5 // pred_fallthru
        _
      %p474 = scmp.le.s32.totalorder 2, %s19
      // Predicated region
      $region49: #{tpu_custom_call.1} parent=5 // pred_check
        %p475 = pneg %p474
      $region50: #{tpu_custom_call.1} parent=5 // pred_check_branch
        %477 = sbr.rel (%p475) target = $region52
      $region51: #{tpu_custom_call.1} parent=5 // pred_region
        %s478 = ssub.s32 %s19, 2
        // Predicated region
        $region53: #{tpu_custom_call.1} parent=51 // pred_check
          %p479 = pneg %p170
        $region54: #{tpu_custom_call.1} parent=51 // pred_check_branch
          %481 = sbr.rel (%p479) target = $region56
        $region55: #{tpu_custom_call.1} parent=51 // pred_region
          %s482 = sand.u32 %s155, 1
          %s483 = scalar_lea.sflag [#allocation4], %s482
          %s484 = sand.u32 %s155, 1
          %s485 = scalar_lea.vmem [#allocation7], %s484
          %486 = dma.done %s483, 16
        $region56: #{tpu_custom_call.1} parent=51 // pred_fallthru
          _
      $region52: #{tpu_custom_call.1} parent=5 // pred_fallthru
        _
    $region6: #{tpu_custom_call.1} parent=1 // loop_footer
      %s23 = sadd.s32 1, %s19
    $region7: #{tpu_custom_call.1} parent=1 // loop_footer_branch
      %18 = sbr.rel target = $region3
    $region8: #{tpu_custom_call.1} parent=1 // loop_exit
      _
    %487 = vsyncpa [#allocation3], 1
    %s488 = scalar_lea.sflag [#allocation3], 1
    %489 = vsyncpa %s488, 1
    %490 = vsyncpa [#allocation6], 1
    %s491 = scalar_lea.sflag [#allocation6], 1
    %492 = vsyncpa %s491, 1
    %493 = vsyncpa [#allocation4], 1
    %s494 = scalar_lea.sflag [#allocation4], 1
    %495 = vsyncpa %s494, 1

</llo_original>
